<compile_context>
chip_gen: v7x
topology: tpu7x:2x2x1
jax: 0.10.0
libtpu: 0.0.40
codegen_flags: <defaults>
</compile_context>

<pallas_src>
import jax
import jax.numpy as jnp
from jax.experimental import pallas as pl
from jax.experimental.pallas import tpu as pltpu

_SUBLANE = 8
_LANE = 128
_STEP_BUDGET_BYTES = 8 * 1024 * 1024    # x + out + params per grid step (x2 for double buffering)
_VMEM_LIMIT_BYTES = 48 * 1024 * 1024    # headroom under v7x's 64 MiB physical VMEM


def _round_up(a, m):
    return (a + m - 1) // m * m


def scale_kernel(wb_ref, x_ref, o_ref):
    # wb_ref: (row_tile, 2) — column 0 = per-row weight, column 1 = per-row bias.
    # x_ref / o_ref: (row_tile, col_tile) tiles of the (N*C, H*W) view of x.
    w = wb_ref[:, 0:1]                      # static lane slices: essentially free
    b = wb_ref[:, 1:2]
    o_ref[...] = x_ref[...] * w + b


def scale_forward(x, weight, bias):
    """Caffe/PyTorch Scale: y[n, c, h, w] = x[n, c, h, w] * weight[c] + bias[c]."""
    N, C, H, W = x.shape
    rows = N * C
    hw = H * W
    itemsize = jnp.dtype(x.dtype).itemsize

    # Lane-dense 2D view (free reshape for contiguous NCHW).
    x2d = x.reshape(rows, hw)

    # Pack weight & bias into one (rows, 2) array; row n*C + c gets (w[c], b[c]).
    w_rows = jnp.tile(weight.astype(x.dtype), N)
    b_rows = jnp.tile(bias.astype(x.dtype), N)
    wb = jnp.stack([w_rows, b_rows], axis=1)          # (rows, 2)

    # ---------------- tile sizing ----------------
    # Per block-row bytes: x tile + out tile + lane-padded param row (2 -> 128 lanes).
    param_row_bytes = _LANE * itemsize
    full_width_row_bytes = 2 * hw * itemsize + param_row_bytes

    if _SUBLANE * full_width_row_bytes <= _STEP_BUDGET_BYTES:
        # Full spatial slab fits: no column tiling (full-extent lane dim is
        # always layout-legal, even when H*W is not a multiple of 128).
        # TODO(synk): for non-128-multiple H*W the stores are masked; padding
        # the lane dim would make them unmasked at the cost of extra traffic.
        col_tile = hw
    else:
        # Very large H*W: tile lanes in 128-multiples so blocks stay bounded
        # (guaranteed < budget even double-buffered; last block may be ragged).
        col_tile = ((_STEP_BUDGET_BYTES // _SUBLANE - param_row_bytes)
                    // (2 * itemsize)) // _LANE * _LANE
        col_tile = max(_LANE, col_tile)

    block_row_bytes = 2 * col_tile * itemsize + param_row_bytes
    row_tile = max(_SUBLANE,
                   (_STEP_BUDGET_BYTES // block_row_bytes) // _SUBLANE * _SUBLANE)
    if rows <= _SUBLANE:
        row_tile = rows                                   # full-extent block
    else:
        row_tile = min(row_tile, rows // _SUBLANE * _SUBLANE)

    col_steps = pl.cdiv(hw, col_tile)
    # Megacore (v7x): never collapse to one grid step when there is enough work
    # for both TensorCores to stream.
    if col_steps * pl.cdiv(rows, row_tile) == 1 and rows >= 2 * _SUBLANE:
        row_tile = _round_up(pl.cdiv(rows, 2), _SUBLANE)
    row_steps = pl.cdiv(rows, row_tile)

    # Rows outer, columns inner => the wb block index only changes with the row
    # step, so its DMA is not repeated across column steps.
    grid = (row_steps, col_steps)

    out2d = pl.pallas_call(
        scale_kernel,
        out_shape=jax.ShapeDtypeStruct((rows, hw), x.dtype),
        grid=grid,
        in_specs=[
            pl.BlockSpec((row_tile, 2), lambda i, j: (i, 0)),          # packed w/b
            pl.BlockSpec((row_tile, col_tile), lambda i, j: (i, j)),   # x tile
        ],
        out_specs=pl.BlockSpec((row_tile, col_tile), lambda i, j: (i, j)),
        compiler_params=pltpu.CompilerParams(
            dimension_semantics=("parallel", "parallel"),
            vmem_limit_bytes=_VMEM_LIMIT_BYTES,
        ),
    )(wb, x2d)

    return out2d.reshape(N, C, H, W)


# Jitted entry point: fuses param packing / reshapes with the kernel dispatch.
scale_forward_jit = jax.jit(scale_forward)


if __name__ == "__main__":
    key = jax.random.PRNGKey(0)

    # Primary check: small NCHW consistent with the module.
    N, C, H, W = 2, 4, 16, 16
    kx, kw, kb = jax.random.split(key, 3)
    # PyTorch's Parameter(torch.Tensor(C)) is uninitialized; fill deterministically.
    x = jax.random.normal(kx, (N, C, H, W), dtype=jnp.float32)
    weight = jax.random.normal(kw, (C,), dtype=jnp.float32)
    bias = jax.random.normal(kb, (C,), dtype=jnp.float32)

    out = jax.block_until_ready(scale_forward_jit(x, weight, bias))
    ref = x * weight.reshape(1, C, 1, 1) + bias.reshape(1, C, 1, 1)
    assert out.shape == (N, C, H, W) and out.dtype == x.dtype
    assert jnp.allclose(out, ref, atol=1e-6), "Pallas result mismatch vs reference"

    # Secondary robustness check: odd channel count and non-128-multiple H*W.
    N2, C2, H2, W2 = 1, 3, 14, 14
    k2x, k2w, k2b = jax.random.split(jax.random.PRNGKey(0), 3)
    x2 = jax.random.normal(k2x, (N2, C2, H2, W2), dtype=jnp.float32)
    w2 = jax.random.normal(k2w, (C2,), dtype=jnp.float32)
    b2 = jax.random.normal(k2b, (C2,), dtype=jnp.float32)
    out2 = jax.block_until_ready(scale_forward_jit(x2, w2, b2))
    ref2 = x2 * w2.reshape(1, C2, 1, 1) + b2.reshape(1, C2, 1, 1)
    assert jnp.allclose(out2, ref2, atol=1e-6), "Pallas result mismatch (odd shapes)"

    print("KERNEL_OK")
</pallas_src>

<mosaic_0001>
module attributes {stable_mosaic.version = 11 : i64} {
  func.func @scale_kernel(%arg0: i32, %arg1: i32, %arg2: memref<8x2xf32, #tpu.memory_space<vmem>>, %arg3: memref<8x256xf32, #tpu.memory_space<vmem>>, %arg4: memref<8x256xf32, #tpu.memory_space<vmem>>) attributes {dimension_semantics = [#tpu.dimension_semantics<parallel>, #tpu.dimension_semantics<parallel>], iteration_bounds = array<i64: 1, 1>, scalar_prefetch = 0 : i64, scratch_operands = 0 : i64, tpu.core_type = #tpu.core_type<tc>, window_params = [{transform_indices = @transform_0, window_bounds = array<i64: 8, 2>}, {transform_indices = @transform_1, window_bounds = array<i64: 8, 256>}, {transform_indices = @transform_2, window_bounds = array<i64: 8, 256>}]} {
    %c0 = arith.constant 0 : index
    %c0_0 = arith.constant 0 : index
    %0 = vector.load %arg2[%c0, %c0_0] : memref<8x2xf32, #tpu.memory_space<vmem>>, vector<8x1xf32>
    %c0_1 = arith.constant 0 : index
    %c1 = arith.constant 1 : index
    %1 = vector.load %arg2[%c0_1, %c1] : memref<8x2xf32, #tpu.memory_space<vmem>>, vector<8x1xf32>
    %c0_2 = arith.constant 0 : index
    %c0_3 = arith.constant 0 : index
    %2 = vector.load %arg3[%c0_2, %c0_3] : memref<8x256xf32, #tpu.memory_space<vmem>>, vector<8x256xf32>
    %3 = vector.broadcast %0 : vector<8x1xf32> to vector<8x256xf32>
    %4 = arith.mulf %2, %3 : vector<8x256xf32>
    %5 = vector.broadcast %1 : vector<8x1xf32> to vector<8x256xf32>
    %6 = arith.addf %4, %5 : vector<8x256xf32>
    %c0_4 = arith.constant 0 : index
    %c0_5 = arith.constant 0 : index
    %7 = vector.load %arg4[%c0_4, %c0_5] : memref<8x256xf32, #tpu.memory_space<vmem>>, vector<8x256xf32>
    tpu.vector_store %arg4[%c0_4, %c0_5], %6 {strides = array<i32>} : memref<8x256xf32, #tpu.memory_space<vmem>>, vector<8x256xf32>,
    return
  }
  func.func @transform_0(%arg0: i32, %arg1: i32) -> (i32, i32) {
    %c0_i32 = arith.constant 0 : i32
    %c0_i32_0 = arith.constant 0 : i32
    return %arg0, %c0_i32 : i32, i32
  }
  func.func @transform_1(%arg0: i32, %arg1: i32) -> (i32, i32) {
    %c0_i32 = arith.constant 0 : i32
    return %arg0, %arg1 : i32, i32
  }
  func.func @transform_2(%arg0: i32, %arg1: i32) -> (i32, i32) {
    %c0_i32 = arith.constant 0 : i32
    return %arg0, %arg1 : i32, i32
  }
}

</mosaic_0001>

<llo_original>
// kernel: tile.13
$region0: #{tile.13}
  #allocation0 [shape = 's32[1]{0}', space=sflag, size = 0x4, scoped, tag = 'scoped memory for tile.13']
  %s0 = inlined_call_operand.vmem [shape: f32[4], index: 0, kind: input, shape index: {}]
  %s1 = inlined_call_operand.vmem [shape: f32[2,4], index: 1, kind: output, shape index: {}]
  // Predicated region
  $region2: #{tile.13} parent=0 // pred_check
    _
  $region3: #{tile.13} parent=0 // pred_check_branch
    %3 = sbr.rel (0) target = $region5
  $region4: #{tile.13} parent=0 // pred_region
    _
  $region5: #{tile.13} parent=0 // pred_fallthru
    _
  %v4 = vld [vmem:[%s0] ss:$0 sm:$0xff]
  %5 = vst [vmem:[%s1] sm:$0x3] %v4

// kernel: tile.18
$region0: #{tile.18}
  %s0 = inlined_call_operand.vmem [shape: f32[2,4], index: 0, kind: input, shape index: {}]
  %s1 = inlined_call_operand.vmem [shape: f32[8,1], index: 1, kind: output, shape index: {}]
  $region1: #{tile.18} parent=0
    #allocation0 [shape = 'u8[4096]{0}', space=vmem, size = 0x1000, scoped, tag = 'scoped mem for output reshape']
    #allocation1 [shape = 'u8[4096]{0}', space=vmem, size = 0x1000, scoped, tag = 'scoped mem for input reshape']
    %s3 = sshllo.u32 0, 2
    %v4 = vld [vmem:[%s0] sm:%s3]
    %5 = vst [vmem:[#allocation1] sm:%s3] %v4
    %v6 = vld [vmem:[#allocation1] sm:$0x1]
    %vm7 = vcmask 31744
    %8 = vst.msk [vmem:[#allocation0] sm:$0x1] %vm7, %v6
    %s9 = scalar_lea.vmem [#allocation1], 1
    %v10 = vld [vmem:[%s9] sm:$0x1]
    %11 = vrot.lane.b32.xlu0 %v10, 4
    %v12 = vpop.permute.xlu0 %11
    %vm13 = vcmask 64544
    %14 = vst.msk [vmem:[#allocation0] sm:$0x1] %vm13, %v12
    %s16 = sshllo.u32 0, 1
    %v18 = vld [vmem:[#allocation0] sm:%s16]
    %s19 = sshllo.u32 0, 1
    %20 = vst [vmem:[%s1] sm:%s19] %v18

// kernel: scale_forward.1
$region0: #{scale_forward.1}
  #allocation0 [shape = 'u32[]', space=smem, size = 0x4, offset = 0x4, fixed_abs, tag = 'smem constant byte address 0x4 - core index']
  #allocation1 [shape = 'u32[144,128]{1,0:T(1,128)}', space=vmem, size = 0x12000, scoped, tag = 'internal scratch']
  %s0 = inlined_call_operand.vmem [shape: f32[8,2], index: 0, kind: input, shape index: {}]
  %s1 = inlined_call_operand.vmem [shape: f32[8,256], index: 1, kind: input, shape index: {}]
  %s2 = inlined_call_operand.vmem [shape: f32[8,256], index: 2, kind: output, shape index: {}]
  %s3 = sld [smem:[#allocation0]]
  $region18: #{scale_forward.1} parent=0
    _
  %s5 = ssub.s32 1, %s3
  %s6 = scalar_select 0, %s5, %s3
  // Predicated region
  $region2: #{scale_forward.1} parent=0 // pred_check
    _
  $region3: #{scale_forward.1} parent=0 // pred_check_branch
    %8 = sbr.rel (0) target = $region5
  $region4: #{scale_forward.1} parent=0 // pred_region
    _
  $region5: #{scale_forward.1} parent=0 // pred_fallthru
    _
  // Predicated region
  $region6: #{scale_forward.1} parent=0 // pred_check
    _
  $region7: #{scale_forward.1} parent=0 // pred_check_branch
    %10 = sbr.rel (0) target = $region9
  $region8: #{scale_forward.1} parent=0 // pred_region
    _
  $region9: #{scale_forward.1} parent=0 // pred_fallthru
    _
  %v11 = vld [vmem:[%s0] sm:$0xff]
  %v12 = vld [vmem:[%s1] sm:$0xff]
  %v13 = vld [vmem:[%s1 + $0x8] sm:$0xff]
  %15 = vset.pattern.permute.xlu0 0
  %16 = vperm.xlu0 %15, %v11
  %v17 = vpop.permute.xlu0 %16
  %v19 = vmul.f32 %v12, %v17
  %v20 = vmul.f32 %v13, %v17
  %21 = vset.pattern.permute.xlu0 1
  %22 = vperm.xlu0 %21, %v11
  %v23 = vpop.permute.xlu0 %22
  %v25 = vadd.f32 %v19, %v23
  %v26 = vadd.f32 %v20, %v23
  %27 = vst [vmem:[%s2] sm:$0xff] %v25
  %28 = vst [vmem:[%s2 + $0x8] sm:$0xff] %v26
  // Predicated region
  $region10: #{scale_forward.1} parent=0 // pred_check
    _
  $region11: #{scale_forward.1} parent=0 // pred_check_branch
    %30 = sbr.rel (0) target = $region13
  $region12: #{scale_forward.1} parent=0 // pred_region
    _
  $region13: #{scale_forward.1} parent=0 // pred_fallthru
    _
  // Predicated region
  $region14: #{scale_forward.1} parent=0 // pred_check
    _
  $region15: #{scale_forward.1} parent=0 // pred_check_branch
    %32 = sbr.rel (0) target = $region17
  $region16: #{scale_forward.1} parent=0 // pred_region
    _
  $region17: #{scale_forward.1} parent=0 // pred_fallthru
    _

</llo_original>
